<compile_context>
chip_gen: v5e
topology: v5e:2x2
jax: 0.10.0
libtpu: 0.0.40
codegen_flags: <defaults>
</compile_context>

<pallas_src>
import functools

import jax
import jax.numpy as jnp
from jax.experimental import pallas as pl
from jax.experimental.pallas import tpu as pltpu

BN_EPS = 1e-5


def _round_up(x, m):
    return (x + m - 1) // m * m


def _make_conv_stats_kernel(b_blk, c_in, c_out, k, wp, lp):
    """Conv via one fused-K matmul (taps folded into K) + per-block BN partial stats."""

    def kernel(x_ref, w_ref, mask_ref, y_ref, sum_ref, ssq_ref):
        # x_ref:   (B, C_in, LF)        padded flat images, spatial on lanes
        # w_ref:   (C_out, k*k*C_in)    tap-fused weight matrix
        # mask_ref:(1, B*LP)            1.0 on valid output columns, 0.0 on junk cols
        # y_ref:   (B, C_out, LP)       conv result (LP multiple of 128 -> full-lane stores)
        # sum_ref / ssq_ref: (1, C_out, 1) masked per-channel partial sum / sum-of-squares
        cols = []
        for bi in range(b_blk):
            taps = []
            for dh in range(k):
                for dw in range(k):
                    off = dh * wp + dw                         # static offset
                    taps.append(x_ref[bi, :, off:off + lp])    # (C_in, LP) static slice
            cols.append(jnp.concatenate(taps, axis=0))         # (k*k*C_in, LP)
        xk = cols[0] if b_blk == 1 else jnp.concatenate(cols, axis=1)   # (K, B*LP)

        # Single MXU contraction of depth K = k*k*C_in over B*LP lanes.
        acc = jnp.dot(w_ref[...], xk, preferred_element_type=jnp.float32)  # (C_out, B*LP) f32

        for bi in range(b_blk):
            # Lane-aligned (multiple-of-128) slice -> unmasked wide store.
            y_ref[bi] = acc[:, bi * lp:(bi + 1) * lp].astype(y_ref.dtype)

        ym = acc * mask_ref[...]                     # exclude junk columns from BN stats
        sum_ref[0] = jnp.sum(ym, axis=1, keepdims=True)
        ssq_ref[0] = jnp.sum(ym * ym, axis=1, keepdims=True)

    return kernel


@functools.partial(jax.jit, static_argnames=("kernel_size", "padding", "compute_dtype"))
def dil_conv(x, weight, gamma, beta, *, kernel_size, padding, compute_dtype=None):
    """DilConv forward: Conv2d(k, padding, stride=1, bias=False) + BatchNorm2d (batch stats).

    x: (N, C_in, H, W) NCHW; weight: (C_out, C_in, k, k) OIHW; gamma/beta: (C_out,).
    compute_dtype: optional matmul-operand / conv-intermediate dtype (e.g. jnp.bfloat16 on
    v6e/v7x); accumulation and all BN statistics stay float32.  Keep None on v5e / for
    f32 parity with the reference.
    """
    n, c_in, h, w = x.shape
    c_out = weight.shape[0]
    k = kernel_size
    hp, wp = h + 2 * padding, w + 2 * padding
    ho, wo = hp - k + 1, wp - k + 1
    assert ho >= 1 and wo >= 1, (ho, wo)

    lflat = hp * wp
    max_off = (k - 1) * wp + (k - 1)
    lp = _round_up(ho * wp, 128)        # flat output length, padded to full lanes
    lf = _round_up(lp + max_off, 128)   # flat input length (every tap slice stays in bounds)
    kk = k * k * c_in

    mm_dtype = jnp.float32 if compute_dtype is None else jnp.dtype(compute_dtype)
    y_dtype = jnp.float32 if compute_dtype is None else mm_dtype  # bf16 intermediate opt-in

    # Pad once (conv padding) and tail-pad the flat spatial axis to LF lanes.
    xp = jnp.pad(x, ((0, 0), (0, 0), (padding, padding), (padding, padding)))
    x_flat = jnp.pad(xp.reshape(n, c_in, lflat), ((0, 0), (0, 0), (0, lf - lflat)))
    x_flat = x_flat.astype(mm_dtype)

    # OIHW -> (C_out, k*k*C_in): fold all taps into one contraction dimension.
    w_fused = jnp.transpose(weight, (0, 2, 3, 1)).reshape(c_out, kk).astype(mm_dtype)

    # Images per grid step: whole batch when it fits, else the largest divisor of n
    # whose (double-buffered) working set stays well inside VMEM (conservative for
    # v7x's 64 MiB physical / 32 MiB scoped VMEM).
    per_img = (c_in * lf * jnp.dtype(mm_dtype).itemsize         # input block
               + (kk + 2 * c_out) * lp * 4                      # concat operand + f32 acc
               + c_out * lp * jnp.dtype(y_dtype).itemsize)      # output block
    budget = 8 * 1024 * 1024
    b_blk = 1
    for cand in range(1, n + 1):
        if n % cand == 0 and cand * per_img <= budget:
            b_blk = cand
    n_blk = n // b_blk

    # Validity mask over flat output columns (drops row-padding and tail-padding cols).
    p = jnp.arange(lp)
    mask1 = ((p < ho * wp) & ((p % wp) < wo)).astype(jnp.float32)
    mask = jnp.tile(mask1, (b_blk,)).reshape(1, b_blk * lp)

    itemsize = jnp.dtype(mm_dtype).itemsize
    cost = pl.CostEstimate(
        flops=2 * n * lp * kk * c_out,
        transcendentals=0,
        bytes_accessed=(x_flat.size * itemsize + w_fused.size * itemsize
                        + n * c_out * lp * jnp.dtype(y_dtype).itemsize
                        + 2 * n_blk * c_out * 4),
    )

    # TODO(synk): for large H*C_out the per-block scheme should switch to Ho-row tiles
    # with a (k-1)-row halo via manual make_async_copy (overlapping input windows are
    # not expressible with Blocked index maps); per-image/batch blocks suffice here.
    kernel = _make_conv_stats_kernel(b_blk, c_in, c_out, k, wp, lp)
    conv, psum, pssq = pl.pallas_call(
        kernel,
        out_shape=(
            jax.ShapeDtypeStruct((n, c_out, lp), y_dtype),
            jax.ShapeDtypeStruct((n_blk, c_out, 1), jnp.float32),
            jax.ShapeDtypeStruct((n_blk, c_out, 1), jnp.float32),
        ),
        grid=(n_blk,),
        in_specs=[
            pl.BlockSpec((b_blk, c_in, lf), lambda i: (i, 0, 0)),
            pl.BlockSpec((c_out, kk), lambda i: (0, 0)),
            pl.BlockSpec((1, b_blk * lp), lambda i: (0, 0)),
        ],
        out_specs=(
            pl.BlockSpec((b_blk, c_out, lp), lambda i: (i, 0, 0)),
            pl.BlockSpec((1, c_out, 1), lambda i: (i, 0, 0)),
            pl.BlockSpec((1, c_out, 1), lambda i: (i, 0, 0)),
        ),
        compiler_params=pltpu.CompilerParams(
            dimension_semantics=("parallel",),       # independent blocks (megacore on v7x)
            vmem_limit_bytes=32 * 1024 * 1024,
        ),
        cost_estimate=cost,
    )(x_flat, w_fused, mask)

    # BatchNorm moment finalize: tiny O(C_out) work, all f32.
    count = jnp.float32(n * ho * wo)
    mean = jnp.sum(psum, axis=0) / count                                  # (C_out, 1)
    var = jnp.maximum(jnp.sum(pssq, axis=0) / count - mean * mean, 0.0)   # biased variance
    inv_std = jax.lax.rsqrt(var + BN_EPS)
    scale = gamma.reshape(c_out, 1).astype(jnp.float32) * inv_std
    shift = beta.reshape(c_out, 1).astype(jnp.float32) - mean * scale

    # BN apply fused (by XLA) with the junk-column drop + NCHW restore: exactly one read
    # of the conv intermediate and one write of the final output — no second pallas pass.
    bn = conv.astype(jnp.float32) * scale[None] + shift[None]             # (N, C_out, LP)
    out = bn[:, :, :ho * wp].reshape(n, c_out, ho, wp)[:, :, :, :wo]
    return out.astype(x.dtype)


def _reference(x, weight, gamma, beta, padding):
    conv = jax.lax.conv_general_dilated(
        x, weight,
        window_strides=(1, 1),
        padding=[(padding, padding), (padding, padding)],
        dimension_numbers=("NCHW", "OIHW", "NCHW"),
    )
    mean = jnp.mean(conv, axis=(0, 2, 3), keepdims=True)
    var = jnp.mean((conv - mean) ** 2, axis=(0, 2, 3), keepdims=True)
    g = gamma.reshape(1, -1, 1, 1)
    b = beta.reshape(1, -1, 1, 1)
    return g * (conv - mean) * jax.lax.rsqrt(var + BN_EPS) + b


if __name__ == "__main__":
    # Module config: DilConv(C_in=4, C_out=8, kernel_size=3, padding=1, affine=True)
    C_in, C_out, K, PAD = 4, 8, 3, 1
    N, H, W = 2, 16, 16

    key = jax.random.PRNGKey(0)
    kx, kw = jax.random.split(key)
    x = jax.random.normal(kx, (N, C_in, H, W), dtype=jnp.float32)
    # Conv2d weight (OIHW, bias=False); BatchNorm2d affine params at PyTorch defaults.
    weight = jax.random.normal(kw, (C_out, C_in, K, K), dtype=jnp.float32) * 0.1
    gamma = jnp.ones((C_out,), dtype=jnp.float32)
    beta = jnp.zeros((C_out,), dtype=jnp.float32)

    out = dil_conv(x, weight, gamma, beta, kernel_size=K, padding=PAD)
    out = jax.block_until_ready(out)

    ref = _reference(x, weight, gamma, beta, PAD)
    assert out.shape == (N, C_out, H, W), out.shape
    err = float(jnp.max(jnp.abs(out - ref)))
    assert jnp.allclose(out, ref, atol=1e-4, rtol=1e-4), err
    print("KERNEL_OK")
</pallas_src>

<mosaic_0001>
module attributes {stable_mosaic.version = 11 : i64} {
  func.func @kernel(%arg0: i32, %arg1: memref<2x4x512xf32, #tpu.memory_space<vmem>>, %arg2: memref<8x36xf32, #tpu.memory_space<vmem>>, %arg3: memref<1x768xf32, #tpu.memory_space<vmem>>, %arg4: memref<2x8x384xf32, #tpu.memory_space<vmem>>, %arg5: memref<1x8x1xf32, #tpu.memory_space<vmem>>, %arg6: memref<1x8x1xf32, #tpu.memory_space<vmem>>) attributes {dimension_semantics = [#tpu.dimension_semantics<parallel>], iteration_bounds = array<i64: 1>, scalar_prefetch = 0 : i64, scratch_operands = 0 : i64, tpu.core_type = #tpu.core_type<tc>, window_params = [{transform_indices = @transform_0, window_bounds = array<i64: 2, 4, 512>}, {pipeline_mode = #tpu.pipeline_mode<synchronous>, transform_indices = @transform_1, window_bounds = array<i64: 8, 36>}, {pipeline_mode = #tpu.pipeline_mode<synchronous>, transform_indices = @transform_2, window_bounds = array<i64: 1, 768>}, {transform_indices = @transform_3, window_bounds = array<i64: 2, 8, 384>}, {transform_indices = @transform_4, window_bounds = array<i64: 1, 8, 1>}, {transform_indices = @transform_5, window_bounds = array<i64: 1, 8, 1>}]} {
    %c0 = arith.constant 0 : index
    %c0_0 = arith.constant 0 : index
    %c0_1 = arith.constant 0 : index
    %0 = vector.load %arg1[%c0, %c0_0, %c0_1] : memref<2x4x512xf32, #tpu.memory_space<vmem>>, vector<1x4x384xf32>
    %1 = vector.shape_cast %0 : vector<1x4x384xf32> to vector<4x384xf32>
    %c0_2 = arith.constant 0 : index
    %c0_3 = arith.constant 0 : index
    %c1 = arith.constant 1 : index
    %2 = vector.load %arg1[%c0_2, %c0_3, %c1] : memref<2x4x512xf32, #tpu.memory_space<vmem>>, vector<1x4x384xf32>
    %3 = vector.shape_cast %2 : vector<1x4x384xf32> to vector<4x384xf32>
    %c0_4 = arith.constant 0 : index
    %c0_5 = arith.constant 0 : index
    %c2 = arith.constant 2 : index
    %4 = vector.load %arg1[%c0_4, %c0_5, %c2] : memref<2x4x512xf32, #tpu.memory_space<vmem>>, vector<1x4x384xf32>
    %5 = vector.shape_cast %4 : vector<1x4x384xf32> to vector<4x384xf32>
    %c0_6 = arith.constant 0 : index
    %c0_7 = arith.constant 0 : index
    %c18 = arith.constant 18 : index
    %6 = vector.load %arg1[%c0_6, %c0_7, %c18] : memref<2x4x512xf32, #tpu.memory_space<vmem>>, vector<1x4x384xf32>
    %7 = vector.shape_cast %6 : vector<1x4x384xf32> to vector<4x384xf32>
    %c0_8 = arith.constant 0 : index
    %c0_9 = arith.constant 0 : index
    %c19 = arith.constant 19 : index
    %8 = vector.load %arg1[%c0_8, %c0_9, %c19] : memref<2x4x512xf32, #tpu.memory_space<vmem>>, vector<1x4x384xf32>
    %9 = vector.shape_cast %8 : vector<1x4x384xf32> to vector<4x384xf32>
    %c0_10 = arith.constant 0 : index
    %c0_11 = arith.constant 0 : index
    %c20 = arith.constant 20 : index
    %10 = vector.load %arg1[%c0_10, %c0_11, %c20] : memref<2x4x512xf32, #tpu.memory_space<vmem>>, vector<1x4x384xf32>
    %11 = vector.shape_cast %10 : vector<1x4x384xf32> to vector<4x384xf32>
    %c0_12 = arith.constant 0 : index
    %c0_13 = arith.constant 0 : index
    %c36 = arith.constant 36 : index
    %12 = vector.load %arg1[%c0_12, %c0_13, %c36] : memref<2x4x512xf32, #tpu.memory_space<vmem>>, vector<1x4x384xf32>
    %13 = vector.shape_cast %12 : vector<1x4x384xf32> to vector<4x384xf32>
    %c0_14 = arith.constant 0 : index
    %c0_15 = arith.constant 0 : index
    %c37 = arith.constant 37 : index
    %14 = vector.load %arg1[%c0_14, %c0_15, %c37] : memref<2x4x512xf32, #tpu.memory_space<vmem>>, vector<1x4x384xf32>
    %15 = vector.shape_cast %14 : vector<1x4x384xf32> to vector<4x384xf32>
    %c0_16 = arith.constant 0 : index
    %c0_17 = arith.constant 0 : index
    %c38 = arith.constant 38 : index
    %16 = vector.load %arg1[%c0_16, %c0_17, %c38] : memref<2x4x512xf32, #tpu.memory_space<vmem>>, vector<1x4x384xf32>
    %17 = vector.shape_cast %16 : vector<1x4x384xf32> to vector<4x384xf32>
    %18 = tpu.concatenate %1, %3, %5, %7, %9, %11, %13, %15, %17 in 0 : vector<4x384xf32>, vector<4x384xf32>, vector<4x384xf32>, vector<4x384xf32>, vector<4x384xf32>, vector<4x384xf32>, vector<4x384xf32>, vector<4x384xf32>, vector<4x384xf32> -> vector<36x384xf32>
    %c1_18 = arith.constant 1 : index
    %c0_19 = arith.constant 0 : index
    %c0_20 = arith.constant 0 : index
    %19 = vector.load %arg1[%c1_18, %c0_19, %c0_20] : memref<2x4x512xf32, #tpu.memory_space<vmem>>, vector<1x4x384xf32>
    %20 = vector.shape_cast %19 : vector<1x4x384xf32> to vector<4x384xf32>
    %c1_21 = arith.constant 1 : index
    %c0_22 = arith.constant 0 : index
    %c1_23 = arith.constant 1 : index
    %21 = vector.load %arg1[%c1_21, %c0_22, %c1_23] : memref<2x4x512xf32, #tpu.memory_space<vmem>>, vector<1x4x384xf32>
    %22 = vector.shape_cast %21 : vector<1x4x384xf32> to vector<4x384xf32>
    %c1_24 = arith.constant 1 : index
    %c0_25 = arith.constant 0 : index
    %c2_26 = arith.constant 2 : index
    %23 = vector.load %arg1[%c1_24, %c0_25, %c2_26] : memref<2x4x512xf32, #tpu.memory_space<vmem>>, vector<1x4x384xf32>
    %24 = vector.shape_cast %23 : vector<1x4x384xf32> to vector<4x384xf32>
    %c1_27 = arith.constant 1 : index
    %c0_28 = arith.constant 0 : index
    %c18_29 = arith.constant 18 : index
    %25 = vector.load %arg1[%c1_27, %c0_28, %c18_29] : memref<2x4x512xf32, #tpu.memory_space<vmem>>, vector<1x4x384xf32>
    %26 = vector.shape_cast %25 : vector<1x4x384xf32> to vector<4x384xf32>
    %c1_30 = arith.constant 1 : index
    %c0_31 = arith.constant 0 : index
    %c19_32 = arith.constant 19 : index
    %27 = vector.load %arg1[%c1_30, %c0_31, %c19_32] : memref<2x4x512xf32, #tpu.memory_space<vmem>>, vector<1x4x384xf32>
    %28 = vector.shape_cast %27 : vector<1x4x384xf32> to vector<4x384xf32>
    %c1_33 = arith.constant 1 : index
    %c0_34 = arith.constant 0 : index
    %c20_35 = arith.constant 20 : index
    %29 = vector.load %arg1[%c1_33, %c0_34, %c20_35] : memref<2x4x512xf32, #tpu.memory_space<vmem>>, vector<1x4x384xf32>
    %30 = vector.shape_cast %29 : vector<1x4x384xf32> to vector<4x384xf32>
    %c1_36 = arith.constant 1 : index
    %c0_37 = arith.constant 0 : index
    %c36_38 = arith.constant 36 : index
    %31 = vector.load %arg1[%c1_36, %c0_37, %c36_38] : memref<2x4x512xf32, #tpu.memory_space<vmem>>, vector<1x4x384xf32>
    %32 = vector.shape_cast %31 : vector<1x4x384xf32> to vector<4x384xf32>
    %c1_39 = arith.constant 1 : index
    %c0_40 = arith.constant 0 : index
    %c37_41 = arith.constant 37 : index
    %33 = vector.load %arg1[%c1_39, %c0_40, %c37_41] : memref<2x4x512xf32, #tpu.memory_space<vmem>>, vector<1x4x384xf32>
    %34 = vector.shape_cast %33 : vector<1x4x384xf32> to vector<4x384xf32>
    %c1_42 = arith.constant 1 : index
    %c0_43 = arith.constant 0 : index
    %c38_44 = arith.constant 38 : index
    %35 = vector.load %arg1[%c1_42, %c0_43, %c38_44] : memref<2x4x512xf32, #tpu.memory_space<vmem>>, vector<1x4x384xf32>
    %36 = vector.shape_cast %35 : vector<1x4x384xf32> to vector<4x384xf32>
    %37 = tpu.concatenate %20, %22, %24, %26, %28, %30, %32, %34, %36 in 0 : vector<4x384xf32>, vector<4x384xf32>, vector<4x384xf32>, vector<4x384xf32>, vector<4x384xf32>, vector<4x384xf32>, vector<4x384xf32>, vector<4x384xf32>, vector<4x384xf32> -> vector<36x384xf32>
    %38 = tpu.concatenate %18, %37 in 1 : vector<36x384xf32>, vector<36x384xf32> -> vector<36x768xf32>
    %c0_45 = arith.constant 0 : index
    %c0_46 = arith.constant 0 : index
    %39 = vector.load %arg2[%c0_45, %c0_46] : memref<8x36xf32, #tpu.memory_space<vmem>>, vector<8x36xf32>
    %cst = arith.constant dense<0.000000e+00> : vector<8x768xf32>
    %40 = tpu.matmul %39, %38, %cst {dimension_numbers = #tpu.dot_dimension_numbers<[1], [0], [0], [1], [0, 0, 1, 1], [], []>} : vector<8x36xf32>, vector<36x768xf32>, vector<8x768xf32> -> vector<8x768xf32>
    %41 = vector.extract_strided_slice %40 {offsets = [0, 0], sizes = [8, 384], strides = [1, 1]} : vector<8x768xf32> to vector<8x384xf32>
    %c0_47 = arith.constant 0 : index
    %c0_48 = arith.constant 0 : index
    %c0_49 = arith.constant 0 : index
    %42 = vector.load %arg4[%c0_47, %c0_48, %c0_49] : memref<2x8x384xf32, #tpu.memory_space<vmem>>, vector<1x8x384xf32>
    %43 = vector.shape_cast %42 : vector<1x8x384xf32> to vector<8x384xf32>
    %44 = vector.shape_cast %41 : vector<8x384xf32> to vector<1x8x384xf32>
    tpu.vector_store %arg4[%c0_47, %c0_48, %c0_49], %44 {strides = array<i32>} : memref<2x8x384xf32, #tpu.memory_space<vmem>>, vector<1x8x384xf32>,
    %45 = vector.extract_strided_slice %40 {offsets = [0, 384], sizes = [8, 384], strides = [1, 1]} : vector<8x768xf32> to vector<8x384xf32>
    %c1_50 = arith.constant 1 : index
    %c0_51 = arith.constant 0 : index
    %c0_52 = arith.constant 0 : index
    %46 = vector.load %arg4[%c1_50, %c0_51, %c0_52] : memref<2x8x384xf32, #tpu.memory_space<vmem>>, vector<1x8x384xf32>
    %47 = vector.shape_cast %46 : vector<1x8x384xf32> to vector<8x384xf32>
    %48 = vector.shape_cast %45 : vector<8x384xf32> to vector<1x8x384xf32>
    tpu.vector_store %arg4[%c1_50, %c0_51, %c0_52], %48 {strides = array<i32>} : memref<2x8x384xf32, #tpu.memory_space<vmem>>, vector<1x8x384xf32>,
    %c0_53 = arith.constant 0 : index
    %c0_54 = arith.constant 0 : index
    %49 = vector.load %arg3[%c0_53, %c0_54] : memref<1x768xf32, #tpu.memory_space<vmem>>, vector<1x768xf32>
    %50 = vector.broadcast %49 : vector<1x768xf32> to vector<8x768xf32>
    %51 = arith.mulf %40, %50 : vector<8x768xf32>
    %cst_55 = arith.constant dense<0.000000e+00> : vector<8xf32>
    %52 = vector.multi_reduction <add>, %51, %cst_55 [1] : vector<8x768xf32> to vector<8xf32>
    %53 = vector.shape_cast %52 : vector<8xf32> to vector<8x1xf32>
    %c0_56 = arith.constant 0 : index
    %c0_57 = arith.constant 0 : index
    %c0_58 = arith.constant 0 : index
    %54 = vector.load %arg5[%c0_56, %c0_57, %c0_58] : memref<1x8x1xf32, #tpu.memory_space<vmem>>, vector<1x8x1xf32>
    %55 = vector.shape_cast %54 : vector<1x8x1xf32> to vector<8x1xf32>
    %56 = vector.shape_cast %53 : vector<8x1xf32> to vector<1x8x1xf32>
    tpu.vector_store %arg5[%c0_56, %c0_57, %c0_58], %56 {strides = array<i32>} : memref<1x8x1xf32, #tpu.memory_space<vmem>>, vector<1x8x1xf32>,
    %57 = arith.mulf %51, %51 : vector<8x768xf32>
    %cst_59 = arith.constant dense<0.000000e+00> : vector<8xf32>
    %58 = vector.multi_reduction <add>, %57, %cst_59 [1] : vector<8x768xf32> to vector<8xf32>
    %59 = vector.shape_cast %58 : vector<8xf32> to vector<8x1xf32>
    %c0_60 = arith.constant 0 : index
    %c0_61 = arith.constant 0 : index
    %c0_62 = arith.constant 0 : index
    %60 = vector.load %arg6[%c0_60, %c0_61, %c0_62] : memref<1x8x1xf32, #tpu.memory_space<vmem>>, vector<1x8x1xf32>
    %61 = vector.shape_cast %60 : vector<1x8x1xf32> to vector<8x1xf32>
    %62 = vector.shape_cast %59 : vector<8x1xf32> to vector<1x8x1xf32>
    tpu.vector_store %arg6[%c0_60, %c0_61, %c0_62], %62 {strides = array<i32>} : memref<1x8x1xf32, #tpu.memory_space<vmem>>, vector<1x8x1xf32>,
    return
  }
  func.func @transform_0(%arg0: i32) -> (i32, i32, i32) {
    %c0_i32 = arith.constant 0 : i32
    %c0_i32_0 = arith.constant 0 : i32
    %c0_i32_1 = arith.constant 0 : i32
    return %arg0, %c0_i32, %c0_i32_0 : i32, i32, i32
  }
  func.func @transform_1(%arg0: i32) -> (i32, i32) {
    %c0_i32 = arith.constant 0 : i32
    %c0_i32_0 = arith.constant 0 : i32
    %c0_i32_1 = arith.constant 0 : i32
    return %c0_i32, %c0_i32_0 : i32, i32
  }
  func.func @transform_2(%arg0: i32) -> (i32, i32) {
    %c0_i32 = arith.constant 0 : i32
    %c0_i32_0 = arith.constant 0 : i32
    %c0_i32_1 = arith.constant 0 : i32
    return %c0_i32, %c0_i32_0 : i32, i32
  }
  func.func @transform_3(%arg0: i32) -> (i32, i32, i32) {
    %c0_i32 = arith.constant 0 : i32
    %c0_i32_0 = arith.constant 0 : i32
    %c0_i32_1 = arith.constant 0 : i32
    return %arg0, %c0_i32, %c0_i32_0 : i32, i32, i32
  }
  func.func @transform_4(%arg0: i32) -> (i32, i32, i32) {
    %c0_i32 = arith.constant 0 : i32
    %c0_i32_0 = arith.constant 0 : i32
    %c0_i32_1 = arith.constant 0 : i32
    return %arg0, %c0_i32, %c0_i32_0 : i32, i32, i32
  }
  func.func @transform_5(%arg0: i32) -> (i32, i32, i32) {
    %c0_i32 = arith.constant 0 : i32
    %c0_i32_0 = arith.constant 0 : i32
    %c0_i32_1 = arith.constant 0 : i32
    return %arg0, %c0_i32, %c0_i32_0 : i32, i32, i32
  }
}

</mosaic_0001>

<llo_original>
// kernel: dil_conv.1
$region0: #{dil_conv.1}
  #allocation0 [shape = 'u32[]', space=smem, size = 0x4, offset = 0x4, fixed_abs, tag = 'smem constant byte address 0x4 - core index']
  #allocation1 [shape = 'u32[72,128]{1,0:T(1,128)}', space=vmem, size = 0x9000, scoped, tag = 'internal scratch']
  %s0 = inlined_call_operand.vmem [shape: f32[2,4,512], index: 0, kind: input, shape index: {}]
  %s1 = inlined_call_operand.vmem [shape: f32[8,36], index: 1, kind: input, shape index: {}]
  %s2 = inlined_call_operand.vmem [shape: f32[1,768], index: 2, kind: input, shape index: {}]
  %s3 = inlined_call_operand.vmem [shape: f32[2,8,384], index: 3, kind: output, shape index: {0}]
  %s4 = inlined_call_operand.vmem [shape: f32[1,8,1], index: 4, kind: output, shape index: {1}]
  %s5 = inlined_call_operand.vmem [shape: f32[1,8,1], index: 5, kind: output, shape index: {2}]
  %6 = xla_tuple %s3, %s4, %s5
  %s7 = sld [smem:[#allocation0]]
  $region38: #{dil_conv.1} parent=0
    _
  %s9 = ssub.s32 1, %s7
  %s10 = scalar_select 0, %s9, %s7
  // Predicated region
  $region2: #{dil_conv.1} parent=0 // pred_check
    _
  $region3: #{dil_conv.1} parent=0 // pred_check_branch
    %12 = sbr.rel (0) target = $region5
  $region4: #{dil_conv.1} parent=0 // pred_region
    _
  $region5: #{dil_conv.1} parent=0 // pred_fallthru
    _
  // Predicated region
  $region6: #{dil_conv.1} parent=0 // pred_check
    _
  $region7: #{dil_conv.1} parent=0 // pred_check_branch
    %14 = sbr.rel (0) target = $region9
  $region8: #{dil_conv.1} parent=0 // pred_region
    _
  $region9: #{dil_conv.1} parent=0 // pred_fallthru
    _
  // Predicated region
  $region10: #{dil_conv.1} parent=0 // pred_check
    _
  $region11: #{dil_conv.1} parent=0 // pred_check_branch
    %16 = sbr.rel (0) target = $region13
  $region12: #{dil_conv.1} parent=0 // pred_region
    _
  $region13: #{dil_conv.1} parent=0 // pred_fallthru
    _
  %v17 = vld [vmem:[%s0] sm:$0xff]
  %v18 = vld [vmem:[%s0 + $0x8] sm:$0xf]
  %v19 = vld [vmem:[%s0 + $0x8] sm:$0xff]
  %22 = vst [vmem:[#allocation1] ss:$2 sm:$0xff] %v17
  %s23 = scalar_lea.vmem [#allocation1], 16
  %24 = vst [vmem:[%s23] ss:$2 sm:$0xff] %v18
  %v25 = vld.sshfl [vmem:[#allocation1] sm:$0xff pattern:$0x75316420]
  %v26 = vld.sshfl [vmem:[#allocation1 + $0x8] sm:$0xff pattern:$0x75316420]
  %v27 = vld.sshfl [vmem:[#allocation1 + $0x10] sm:$0xff pattern:$0x75316420]
  %s32 = scalar_lea.vmem [#allocation1], 1
  %33 = vst [vmem:[%s32] ss:$2 sm:$0xff] %v17
  %s34 = scalar_lea.vmem [#allocation1], 17
  %35 = vst [vmem:[%s34] ss:$2 sm:$0xff] %v19
  %v36 = vld.sshfl [vmem:[#allocation1] sm:$0xff pattern:$0x75316420]
  %v37 = vld.sshfl [vmem:[#allocation1 + $0x8] sm:$0xff pattern:$0x75316420]
  %v38 = vld.sshfl [vmem:[#allocation1 + $0x10] sm:$0xff pattern:$0x75316420]
  %v39 = vld.sshfl [vmem:[#allocation1 + $0x18] sm:$0xff pattern:$0x75316420]
  %40 = vrot.lane.b32.xlu0 %v36, 127
  %v41 = vpop.permute.xlu0 %40
  %42 = vrot.lane.b32.xlu0 %v37, 127
  %v43 = vpop.permute.xlu0 %42
  %44 = vrot.lane.b32.xlu0 %v38, 127
  %v45 = vpop.permute.xlu0 %44
  %46 = vrot.lane.b32.xlu0 %v39, 127
  %v47 = vpop.permute.xlu0 %46
  %vm48 = vcmask 1039360
  %v49 = vsel %vm48, %v41, %v43
  %v50 = vsel %vm48, %v43, %v45
  %v51 = vsel %vm48, %v45, %v47
  %55 = vst [vmem:[#allocation1] ss:$2 sm:$0xff] %v17
  %s56 = scalar_lea.vmem [#allocation1], 16
  %57 = vst [vmem:[%s56] ss:$2 sm:$0xff] %v19
  %v58 = vld.sshfl [vmem:[#allocation1] sm:$0xff pattern:$0x75316420]
  %v59 = vld.sshfl [vmem:[#allocation1 + $0x8] sm:$0xff pattern:$0x75316420]
  %v60 = vld.sshfl [vmem:[#allocation1 + $0x10] sm:$0xff pattern:$0x75316420]
  %v61 = vld.sshfl [vmem:[#allocation1 + $0x18] sm:$0xff pattern:$0x75316420]
  %62 = vrot.lane.b32.xlu0 %v58, 126
  %v63 = vpop.permute.xlu0 %62
  %64 = vrot.lane.b32.xlu0 %v59, 126
  %v65 = vpop.permute.xlu0 %64
  %66 = vrot.lane.b32.xlu0 %v60, 126
  %v67 = vpop.permute.xlu0 %66
  %68 = vrot.lane.b32.xlu0 %v61, 126
  %v69 = vpop.permute.xlu0 %68
  %vm70 = vcmask 1031168
  %v71 = vsel %vm70, %v63, %v65
  %v72 = vsel %vm70, %v65, %v67
  %v73 = vsel %vm70, %v67, %v69
  %s77 = scalar_lea.vmem [#allocation1], 1
  %78 = vst [vmem:[%s77] ss:$2 sm:$0xff] %v17
  %s79 = scalar_lea.vmem [#allocation1], 17
  %80 = vst [vmem:[%s79] ss:$2 sm:$0xff] %v19
  %v81 = vld.sshfl [vmem:[#allocation1] sm:$0xff pattern:$0x75316420]
  %v82 = vld.sshfl [vmem:[#allocation1 + $0x8] sm:$0xff pattern:$0x75316420]
  %v83 = vld.sshfl [vmem:[#allocation1 + $0x10] sm:$0xff pattern:$0x75316420]
  %v84 = vld.sshfl [vmem:[#allocation1 + $0x18] sm:$0xff pattern:$0x75316420]
  %85 = vrot.lane.b32.xlu0 %v81, 110
  %v86 = vpop.permute.xlu0 %85
  %87 = vrot.lane.b32.xlu0 %v82, 110
  %v88 = vpop.permute.xlu0 %87
  %89 = vrot.lane.b32.xlu0 %v83, 110
  %v90 = vpop.permute.xlu0 %89
  %91 = vrot.lane.b32.xlu0 %v84, 110
  %v92 = vpop.permute.xlu0 %91
  %vm93 = vcmask 900096
  %v94 = vsel %vm93, %v86, %v88
  %v95 = vsel %vm93, %v88, %v90
  %v96 = vsel %vm93, %v90, %v92
  %100 = vst [vmem:[#allocation1] ss:$2 sm:$0xff] %v17
  %s101 = scalar_lea.vmem [#allocation1], 16
  %102 = vst [vmem:[%s101] ss:$2 sm:$0xff] %v19
  %v103 = vld.sshfl [vmem:[#allocation1] sm:$0xff pattern:$0x75316420]
  %v104 = vld.sshfl [vmem:[#allocation1 + $0x8] sm:$0xff pattern:$0x75316420]
  %v105 = vld.sshfl [vmem:[#allocation1 + $0x10] sm:$0xff pattern:$0x75316420]
  %v106 = vld.sshfl [vmem:[#allocation1 + $0x18] sm:$0xff pattern:$0x75316420]
  %107 = vrot.lane.b32.xlu0 %v103, 109
  %v108 = vpop.permute.xlu0 %107
  %109 = vrot.lane.b32.xlu0 %v104, 109
  %v110 = vpop.permute.xlu0 %109
  %111 = vrot.lane.b32.xlu0 %v105, 109
  %v112 = vpop.permute.xlu0 %111
  %113 = vrot.lane.b32.xlu0 %v106, 109
  %v114 = vpop.permute.xlu0 %113
  %vm115 = vcmask 891904
  %v116 = vsel %vm115, %v108, %v110
  %v117 = vsel %vm115, %v110, %v112
  %v118 = vsel %vm115, %v112, %v114
  %s122 = scalar_lea.vmem [#allocation1], 1
  %123 = vst [vmem:[%s122] ss:$2 sm:$0xff] %v17
  %s124 = scalar_lea.vmem [#allocation1], 17
  %125 = vst [vmem:[%s124] ss:$2 sm:$0xff] %v19
  %v126 = vld.sshfl [vmem:[#allocation1] sm:$0xff pattern:$0x75316420]
  %v127 = vld.sshfl [vmem:[#allocation1 + $0x8] sm:$0xff pattern:$0x75316420]
  %v128 = vld.sshfl [vmem:[#allocation1 + $0x10] sm:$0xff pattern:$0x75316420]
  %v129 = vld.sshfl [vmem:[#allocation1 + $0x18] sm:$0xff pattern:$0x75316420]
  %130 = vrot.lane.b32.xlu0 %v126, 108
  %v131 = vpop.permute.xlu0 %130
  %132 = vrot.lane.b32.xlu0 %v127, 108
  %v133 = vpop.permute.xlu0 %132
  %134 = vrot.lane.b32.xlu0 %v128, 108
  %v135 = vpop.permute.xlu0 %134
  %136 = vrot.lane.b32.xlu0 %v129, 108
  %v137 = vpop.permute.xlu0 %136
  %vm138 = vcmask 883712
  %v139 = vsel %vm138, %v131, %v133
  %v140 = vsel %vm138, %v133, %v135
  %v141 = vsel %vm138, %v135, %v137
  %145 = vst [vmem:[#allocation1] ss:$2 sm:$0xff] %v17
  %s146 = scalar_lea.vmem [#allocation1], 16
  %147 = vst [vmem:[%s146] ss:$2 sm:$0xff] %v19
  %v148 = vld.sshfl [vmem:[#allocation1] sm:$0xff pattern:$0x75316420]
  %v149 = vld.sshfl [vmem:[#allocation1 + $0x8] sm:$0xff pattern:$0x75316420]
  %v150 = vld.sshfl [vmem:[#allocation1 + $0x10] sm:$0xff pattern:$0x75316420]
  %v151 = vld.sshfl [vmem:[#allocation1 + $0x18] sm:$0xff pattern:$0x75316420]
  %152 = vrot.lane.b32.xlu0 %v148, 92
  %v153 = vpop.permute.xlu0 %152
  %154 = vrot.lane.b32.xlu0 %v149, 92
  %v155 = vpop.permute.xlu0 %154
  %156 = vrot.lane.b32.xlu0 %v150, 92
  %v157 = vpop.permute.xlu0 %156
  %158 = vrot.lane.b32.xlu0 %v151, 92
  %v159 = vpop.permute.xlu0 %158
  %vm160 = vcmask 752640
  %v161 = vsel %vm160, %v153, %v155
  %v162 = vsel %vm160, %v155, %v157
  %v163 = vsel %vm160, %v157, %v159
  %s167 = scalar_lea.vmem [#allocation1], 1
  %168 = vst [vmem:[%s167] ss:$2 sm:$0xff] %v17
  %s169 = scalar_lea.vmem [#allocation1], 17
  %170 = vst [vmem:[%s169] ss:$2 sm:$0xff] %v19
  %v171 = vld.sshfl [vmem:[#allocation1] sm:$0xff pattern:$0x75316420]
  %v172 = vld.sshfl [vmem:[#allocation1 + $0x8] sm:$0xff pattern:$0x75316420]
  %v173 = vld.sshfl [vmem:[#allocation1 + $0x10] sm:$0xff pattern:$0x75316420]
  %v174 = vld.sshfl [vmem:[#allocation1 + $0x18] sm:$0xff pattern:$0x75316420]
  %175 = vrot.lane.b32.xlu0 %v171, 91
  %v176 = vpop.permute.xlu0 %175
  %177 = vrot.lane.b32.xlu0 %v172, 91
  %v178 = vpop.permute.xlu0 %177
  %179 = vrot.lane.b32.xlu0 %v173, 91
  %v180 = vpop.permute.xlu0 %179
  %181 = vrot.lane.b32.xlu0 %v174, 91
  %v182 = vpop.permute.xlu0 %181
  %vm183 = vcmask 744448
  %v184 = vsel %vm183, %v176, %v178
  %v185 = vsel %vm183, %v178, %v180
  %v186 = vsel %vm183, %v180, %v182
  %190 = vst [vmem:[#allocation1] ss:$2 sm:$0xff] %v17
  %s191 = scalar_lea.vmem [#allocation1], 16
  %192 = vst [vmem:[%s191] ss:$2 sm:$0xff] %v19
  %v193 = vld.sshfl [vmem:[#allocation1] sm:$0xff pattern:$0x75316420]
  %v194 = vld.sshfl [vmem:[#allocation1 + $0x8] sm:$0xff pattern:$0x75316420]
  %v195 = vld.sshfl [vmem:[#allocation1 + $0x10] sm:$0xff pattern:$0x75316420]
  %v196 = vld.sshfl [vmem:[#allocation1 + $0x18] sm:$0xff pattern:$0x75316420]
  %197 = vrot.lane.b32.xlu0 %v193, 90
  %v198 = vpop.permute.xlu0 %197
  %199 = vrot.lane.b32.xlu0 %v194, 90
  %v200 = vpop.permute.xlu0 %199
  %201 = vrot.lane.b32.xlu0 %v195, 90
  %v202 = vpop.permute.xlu0 %201
  %203 = vrot.lane.b32.xlu0 %v196, 90
  %v204 = vpop.permute.xlu0 %203
  %vm205 = vcmask 736256
  %v206 = vsel %vm205, %v198, %v200
  %v207 = vsel %vm205, %v200, %v202
  %v208 = vsel %vm205, %v202, %v204
  %vm209 = vcmask 1043456
  %v210 = vsel %vm209, %v25, %v49
  %v211 = vsel %vm209, %v26, %v50
  %v212 = vsel %vm209, %v27, %v51
  %v213 = vsel %vm209, %v71, %v94
  %v214 = vsel %vm209, %v72, %v95
  %v215 = vsel %vm209, %v73, %v96
  %v216 = vsel %vm209, %v116, %v139
  %v217 = vsel %vm209, %v117, %v140
  %v218 = vsel %vm209, %v118, %v141
  %v219 = vsel %vm209, %v161, %v184
  %v220 = vsel %vm209, %v162, %v185
  %v221 = vsel %vm209, %v163, %v186
  %s222 = scalar_lea.vmem %s0, 16
  %v223 = vld [vmem:[%s222] sm:$0xff]
  %v224 = vld [vmem:[%s222 + $0x8] sm:$0xf]
  %v225 = vld [vmem:[%s222 + $0x8] sm:$0xff]
  %228 = vst [vmem:[#allocation1] ss:$2 sm:$0xff] %v223
  %s229 = scalar_lea.vmem [#allocation1], 16
  %230 = vst [vmem:[%s229] ss:$2 sm:$0xff] %v224
  %v231 = vld.sshfl [vmem:[#allocation1] sm:$0xff pattern:$0x75316420]
  %v232 = vld.sshfl [vmem:[#allocation1 + $0x8] sm:$0xff pattern:$0x75316420]
  %v233 = vld.sshfl [vmem:[#allocation1 + $0x10] sm:$0xff pattern:$0x75316420]
  %s238 = scalar_lea.vmem [#allocation1], 1
  %239 = vst [vmem:[%s238] ss:$2 sm:$0xff] %v223
  %s240 = scalar_lea.vmem [#allocation1], 17
  %241 = vst [vmem:[%s240] ss:$2 sm:$0xff] %v225
  %v242 = vld.sshfl [vmem:[#allocation1] sm:$0xff pattern:$0x75316420]
  %v243 = vld.sshfl [vmem:[#allocation1 + $0x8] sm:$0xff pattern:$0x75316420]
  %v244 = vld.sshfl [vmem:[#allocation1 + $0x10] sm:$0xff pattern:$0x75316420]
  %v245 = vld.sshfl [vmem:[#allocation1 + $0x18] sm:$0xff pattern:$0x75316420]
  %246 = vrot.lane.b32.xlu0 %v242, 127
  %v247 = vpop.permute.xlu0 %246
  %248 = vrot.lane.b32.xlu0 %v243, 127
  %v249 = vpop.permute.xlu0 %248
  %250 = vrot.lane.b32.xlu0 %v244, 127
  %v251 = vpop.permute.xlu0 %250
  %252 = vrot.lane.b32.xlu0 %v245, 127
  %v253 = vpop.permute.xlu0 %252
  %v254 = vsel %vm48, %v247, %v249
  %v255 = vsel %vm48, %v249, %v251
  %v256 = vsel %vm48, %v251, %v253
  %260 = vst [vmem:[#allocation1] ss:$2 sm:$0xff] %v223
  %s261 = scalar_lea.vmem [#allocation1], 16
  %262 = vst [vmem:[%s261] ss:$2 sm:$0xff] %v225
  %v263 = vld.sshfl [vmem:[#allocation1] sm:$0xff pattern:$0x75316420]
  %v264 = vld.sshfl [vmem:[#allocation1 + $0x8] sm:$0xff pattern:$0x75316420]
  %v265 = vld.sshfl [vmem:[#allocation1 + $0x10] sm:$0xff pattern:$0x75316420]
  %v266 = vld.sshfl [vmem:[#allocation1 + $0x18] sm:$0xff pattern:$0x75316420]
  %267 = vrot.lane.b32.xlu0 %v263, 126
  %v268 = vpop.permute.xlu0 %267
  %269 = vrot.lane.b32.xlu0 %v264, 126
  %v270 = vpop.permute.xlu0 %269
  %271 = vrot.lane.b32.xlu0 %v265, 126
  %v272 = vpop.permute.xlu0 %271
  %273 = vrot.lane.b32.xlu0 %v266, 126
  %v274 = vpop.permute.xlu0 %273
  %v275 = vsel %vm70, %v268, %v270
  %v276 = vsel %vm70, %v270, %v272
  %v277 = vsel %vm70, %v272, %v274
  %s281 = scalar_lea.vmem [#allocation1], 1
  %282 = vst [vmem:[%s281] ss:$2 sm:$0xff] %v223
  %s283 = scalar_lea.vmem [#allocation1], 17
  %284 = vst [vmem:[%s283] ss:$2 sm:$0xff] %v225
  %v285 = vld.sshfl [vmem:[#allocation1] sm:$0xff pattern:$0x75316420]
  %v286 = vld.sshfl [vmem:[#allocation1 + $0x8] sm:$0xff pattern:$0x75316420]
  %v287 = vld.sshfl [vmem:[#allocation1 + $0x10] sm:$0xff pattern:$0x75316420]
  %v288 = vld.sshfl [vmem:[#allocation1 + $0x18] sm:$0xff pattern:$0x75316420]
  %289 = vrot.lane.b32.xlu0 %v285, 110
  %v290 = vpop.permute.xlu0 %289
  %291 = vrot.lane.b32.xlu0 %v286, 110
  %v292 = vpop.permute.xlu0 %291
  %293 = vrot.lane.b32.xlu0 %v287, 110
  %v294 = vpop.permute.xlu0 %293
  %295 = vrot.lane.b32.xlu0 %v288, 110
  %v296 = vpop.permute.xlu0 %295
  %v297 = vsel %vm93, %v290, %v292
  %v298 = vsel %vm93, %v292, %v294
  %v299 = vsel %vm93, %v294, %v296
  %303 = vst [vmem:[#allocation1] ss:$2 sm:$0xff] %v223
  %s304 = scalar_lea.vmem [#allocation1], 16
  %305 = vst [vmem:[%s304] ss:$2 sm:$0xff] %v225
  %v306 = vld.sshfl [vmem:[#allocation1] sm:$0xff pattern:$0x75316420]
  %v307 = vld.sshfl [vmem:[#allocation1 + $0x8] sm:$0xff pattern:$0x75316420]
  %v308 = vld.sshfl [vmem:[#allocation1 + $0x10] sm:$0xff pattern:$0x75316420]
  %v309 = vld.sshfl [vmem:[#allocation1 + $0x18] sm:$0xff pattern:$0x75316420]
  %310 = vrot.lane.b32.xlu0 %v306, 109
  %v311 = vpop.permute.xlu0 %310
  %312 = vrot.lane.b32.xlu0 %v307, 109
  %v313 = vpop.permute.xlu0 %312
  %314 = vrot.lane.b32.xlu0 %v308, 109
  %v315 = vpop.permute.xlu0 %314
  %316 = vrot.lane.b32.xlu0 %v309, 109
  %v317 = vpop.permute.xlu0 %316
  %v318 = vsel %vm115, %v311, %v313
  %v319 = vsel %vm115, %v313, %v315
  %v320 = vsel %vm115, %v315, %v317
  %s324 = scalar_lea.vmem [#allocation1], 1
  %325 = vst [vmem:[%s324] ss:$2 sm:$0xff] %v223
  %s326 = scalar_lea.vmem [#allocation1], 17
  %327 = vst [vmem:[%s326] ss:$2 sm:$0xff] %v225
  %v328 = vld.sshfl [vmem:[#allocation1] sm:$0xff pattern:$0x75316420]
  %v329 = vld.sshfl [vmem:[#allocation1 + $0x8] sm:$0xff pattern:$0x75316420]
  %v330 = vld.sshfl [vmem:[#allocation1 + $0x10] sm:$0xff pattern:$0x75316420]
  %v331 = vld.sshfl [vmem:[#allocation1 + $0x18] sm:$0xff pattern:$0x75316420]
  %332 = vrot.lane.b32.xlu0 %v328, 108
  %v333 = vpop.permute.xlu0 %332
  %334 = vrot.lane.b32.xlu0 %v329, 108
  %v335 = vpop.permute.xlu0 %334
  %336 = vrot.lane.b32.xlu0 %v330, 108
  %v337 = vpop.permute.xlu0 %336
  %338 = vrot.lane.b32.xlu0 %v331, 108
  %v339 = vpop.permute.xlu0 %338
  %v340 = vsel %vm138, %v333, %v335
  %v341 = vsel %vm138, %v335, %v337
  %v342 = vsel %vm138, %v337, %v339
  %346 = vst [vmem:[#allocation1] ss:$2 sm:$0xff] %v223
  %s347 = scalar_lea.vmem [#allocation1], 16
  %348 = vst [vmem:[%s347] ss:$2 sm:$0xff] %v225
  %v349 = vld.sshfl [vmem:[#allocation1] sm:$0xff pattern:$0x75316420]
  %v350 = vld.sshfl [vmem:[#allocation1 + $0x8] sm:$0xff pattern:$0x75316420]
  %v351 = vld.sshfl [vmem:[#allocation1 + $0x10] sm:$0xff pattern:$0x75316420]
  %v352 = vld.sshfl [vmem:[#allocation1 + $0x18] sm:$0xff pattern:$0x75316420]
  %353 = vrot.lane.b32.xlu0 %v349, 92
  %v354 = vpop.permute.xlu0 %353
  %355 = vrot.lane.b32.xlu0 %v350, 92
  %v356 = vpop.permute.xlu0 %355
  %357 = vrot.lane.b32.xlu0 %v351, 92
  %v358 = vpop.permute.xlu0 %357
  %359 = vrot.lane.b32.xlu0 %v352, 92
  %v360 = vpop.permute.xlu0 %359
  %v361 = vsel %vm160, %v354, %v356
  %v362 = vsel %vm160, %v356, %v358
  %v363 = vsel %vm160, %v358, %v360
  %s367 = scalar_lea.vmem [#allocation1], 1
  %368 = vst [vmem:[%s367] ss:$2 sm:$0xff] %v223
  %s369 = scalar_lea.vmem [#allocation1], 17
  %370 = vst [vmem:[%s369] ss:$2 sm:$0xff] %v225
  %v371 = vld.sshfl [vmem:[#allocation1] sm:$0xff pattern:$0x75316420]
  %v372 = vld.sshfl [vmem:[#allocation1 + $0x8] sm:$0xff pattern:$0x75316420]
  %v373 = vld.sshfl [vmem:[#allocation1 + $0x10] sm:$0xff pattern:$0x75316420]
  %v374 = vld.sshfl [vmem:[#allocation1 + $0x18] sm:$0xff pattern:$0x75316420]
  %375 = vrot.lane.b32.xlu0 %v371, 91
  %v376 = vpop.permute.xlu0 %375
  %377 = vrot.lane.b32.xlu0 %v372, 91
  %v378 = vpop.permute.xlu0 %377
  %379 = vrot.lane.b32.xlu0 %v373, 91
  %v380 = vpop.permute.xlu0 %379
  %381 = vrot.lane.b32.xlu0 %v374, 91
  %v382 = vpop.permute.xlu0 %381
  %v383 = vsel %vm183, %v376, %v378
  %v384 = vsel %vm183, %v378, %v380
  %v385 = vsel %vm183, %v380, %v382
  %389 = vst [vmem:[#allocation1] ss:$2 sm:$0xff] %v223
  %s390 = scalar_lea.vmem [#allocation1], 16
  %391 = vst [vmem:[%s390] ss:$2 sm:$0xff] %v225
  %v392 = vld.sshfl [vmem:[#allocation1] sm:$0xff pattern:$0x75316420]
  %v393 = vld.sshfl [vmem:[#allocation1 + $0x8] sm:$0xff pattern:$0x75316420]
  %v394 = vld.sshfl [vmem:[#allocation1 + $0x10] sm:$0xff pattern:$0x75316420]
  %v395 = vld.sshfl [vmem:[#allocation1 + $0x18] sm:$0xff pattern:$0x75316420]
  %396 = vrot.lane.b32.xlu0 %v392, 90
  %v397 = vpop.permute.xlu0 %396
  %398 = vrot.lane.b32.xlu0 %v393, 90
  %v399 = vpop.permute.xlu0 %398
  %400 = vrot.lane.b32.xlu0 %v394, 90
  %v401 = vpop.permute.xlu0 %400
  %402 = vrot.lane.b32.xlu0 %v395, 90
  %v403 = vpop.permute.xlu0 %402
  %v404 = vsel %vm205, %v397, %v399
  %v405 = vsel %vm205, %v399, %v401
  %v406 = vsel %vm205, %v401, %v403
  %v407 = vsel %vm209, %v231, %v254
  %v408 = vsel %vm209, %v232, %v255
  %v409 = vsel %vm209, %v233, %v256
  %v410 = vsel %vm209, %v275, %v297
  %v411 = vsel %vm209, %v276, %v298
  %v412 = vsel %vm209, %v277, %v299
  %v413 = vsel %vm209, %v318, %v340
  %v414 = vsel %vm209, %v319, %v341
  %v415 = vsel %vm209, %v320, %v342
  %v416 = vsel %vm209, %v361, %v383
  %v417 = vsel %vm209, %v362, %v384
  %v418 = vsel %vm209, %v363, %v385
  %v419 = vld [vmem:[%s1] sm:$0xff]
  %vm420 = vcmask 293888
  %v422 = vsel %vm420, %v419, 0
  %v424 = vsel %vm209, %v206, 0
  %v426 = vsel %vm209, %v207, 0
  %v428 = vsel %vm209, %v208, 0
  %v430 = vsel %vm209, %v404, 0
  %v432 = vsel %vm209, %v405, 0
  %v434 = vsel %vm209, %v406, 0
  %436 = vmatpush.msra.mxu0 0.0
  %437 = vmatpush.msra.mxu0 0.0
  %438 = vmatpush.msra.mxu0 0.0
  %439 = vmatpush.msra.mxu0 0.0
  %440 = vmatpush.msra.mxu0 0.0
  %441 = vmatpush.msra.mxu0 0.0
  %442 = vmatpush.msra.mxu0 0.0
  %443 = vmatpush.msra.mxu0 0.0
  %444 = vmatpush.msra.mxu0 0.0
  %445 = vmatpush.msra.mxu0 0.0
  %446 = vmatpush.msra.mxu0 0.0
  %447 = vmatpush.msra.mxu0 %v424
  %448 = vmatpush.msra.mxu0 %v219
  %449 = vmatpush.msra.mxu0 %v216
  %450 = vmatpush.msra.mxu0 %v213
  %451 = vmatpush.msra.mxu0 %v210
  %452 = vmatmul.f32.gmra.mxu0 %v422
  %v453 = vpop.f32.mrf.mxu0
  %v454 = vadd.f32 0.0, %v453
  %455 = vdwg.mxu0
  %456 = vmatpush.msra.mxu0 0.0
  %457 = vmatpush.msra.mxu0 0.0
  %458 = vmatpush.msra.mxu0 0.0
  %459 = vmatpush.msra.mxu0 0.0
  %460 = vmatpush.msra.mxu0 0.0
  %461 = vmatpush.msra.mxu0 0.0
  %462 = vmatpush.msra.mxu0 0.0
  %463 = vmatpush.msra.mxu0 0.0
  %464 = vmatpush.msra.mxu0 0.0
  %465 = vmatpush.msra.mxu0 0.0
  %466 = vmatpush.msra.mxu0 0.0
  %467 = vmatpush.msra.mxu0 %v426
  %468 = vmatpush.msra.mxu0 %v220
  %469 = vmatpush.msra.mxu0 %v217
  %470 = vmatpush.msra.mxu0 %v214
  %471 = vmatpush.msra.mxu0 %v211
  %472 = vmatmul.f32.gmra.mxu0 %v422
  %v473 = vpop.f32.mrf.mxu0
  %v474 = vadd.f32 0.0, %v473
  %475 = vdwg.mxu0
  %476 = vmatpush.msra.mxu0 0.0
  %477 = vmatpush.msra.mxu0 0.0
  %478 = vmatpush.msra.mxu0 0.0
  %479 = vmatpush.msra.mxu0 0.0
  %480 = vmatpush.msra.mxu0 0.0
  %481 = vmatpush.msra.mxu0 0.0
  %482 = vmatpush.msra.mxu0 0.0
  %483 = vmatpush.msra.mxu0 0.0
  %484 = vmatpush.msra.mxu0 0.0
  %485 = vmatpush.msra.mxu0 0.0
  %486 = vmatpush.msra.mxu0 0.0
  %487 = vmatpush.msra.mxu0 %v428
  %488 = vmatpush.msra.mxu0 %v221
  %489 = vmatpush.msra.mxu0 %v218
  %490 = vmatpush.msra.mxu0 %v215
  %491 = vmatpush.msra.mxu0 %v212
  %492 = vmatmul.f32.gmra.mxu0 %v422
  %v493 = vpop.f32.mrf.mxu0
  %v494 = vadd.f32 0.0, %v493
  %495 = vdwg.mxu0
  %496 = vmatpush.msra.mxu0 0.0
  %497 = vmatpush.msra.mxu0 0.0
  %498 = vmatpush.msra.mxu0 0.0
  %499 = vmatpush.msra.mxu0 0.0
  %500 = vmatpush.msra.mxu0 0.0
  %501 = vmatpush.msra.mxu0 0.0
  %502 = vmatpush.msra.mxu0 0.0
  %503 = vmatpush.msra.mxu0 0.0
  %504 = vmatpush.msra.mxu0 0.0
  %505 = vmatpush.msra.mxu0 0.0
  %506 = vmatpush.msra.mxu0 0.0
  %507 = vmatpush.msra.mxu0 %v430
  %508 = vmatpush.msra.mxu0 %v416
  %509 = vmatpush.msra.mxu0 %v413
  %510 = vmatpush.msra.mxu0 %v410
  %511 = vmatpush.msra.mxu0 %v407
  %512 = vmatmul.f32.gmra.mxu0 %v422
  %v513 = vpop.f32.mrf.mxu0
  %v514 = vadd.f32 0.0, %v513
  %515 = vdwg.mxu0
  %516 = vmatpush.msra.mxu0 0.0
  %517 = vmatpush.msra.mxu0 0.0
  %518 = vmatpush.msra.mxu0 0.0
  %519 = vmatpush.msra.mxu0 0.0
  %520 = vmatpush.msra.mxu0 0.0
  %521 = vmatpush.msra.mxu0 0.0
  %522 = vmatpush.msra.mxu0 0.0
  %523 = vmatpush.msra.mxu0 0.0
  %524 = vmatpush.msra.mxu0 0.0
  %525 = vmatpush.msra.mxu0 0.0
  %526 = vmatpush.msra.mxu0 0.0
  %527 = vmatpush.msra.mxu0 %v432
  %528 = vmatpush.msra.mxu0 %v417
  %529 = vmatpush.msra.mxu0 %v414
  %530 = vmatpush.msra.mxu0 %v411
  %531 = vmatpush.msra.mxu0 %v408
  %532 = vmatmul.f32.gmra.mxu0 %v422
  %v533 = vpop.f32.mrf.mxu0
  %v534 = vadd.f32 0.0, %v533
  %535 = vdwg.mxu0
  %536 = vmatpush.msra.mxu0 0.0
  %537 = vmatpush.msra.mxu0 0.0
  %538 = vmatpush.msra.mxu0 0.0
  %539 = vmatpush.msra.mxu0 0.0
  %540 = vmatpush.msra.mxu0 0.0
  %541 = vmatpush.msra.mxu0 0.0
  %542 = vmatpush.msra.mxu0 0.0
  %543 = vmatpush.msra.mxu0 0.0
  %544 = vmatpush.msra.mxu0 0.0
  %545 = vmatpush.msra.mxu0 0.0
  %546 = vmatpush.msra.mxu0 0.0
  %547 = vmatpush.msra.mxu0 %v434
  %548 = vmatpush.msra.mxu0 %v418
  %549 = vmatpush.msra.mxu0 %v415
  %550 = vmatpush.msra.mxu0 %v412
  %551 = vmatpush.msra.mxu0 %v409
  %552 = vmatmul.f32.gmra.mxu0 %v422
  %v553 = vpop.f32.mrf.mxu0
  %v554 = vadd.f32 0.0, %v553
  %555 = vdwg.mxu0
  %556 = vst [vmem:[%s3] sm:$0xff] %v454
  %557 = vst [vmem:[%s3 + $0x8] sm:$0xff] %v474
  %558 = vst [vmem:[%s3 + $0x10] sm:$0xff] %v494
  %s559 = scalar_lea.vmem %s3, 24
  %560 = vst [vmem:[%s559] sm:$0xff] %v514
  %561 = vst [vmem:[%s559 + $0x8] sm:$0xff] %v534
  %562 = vst [vmem:[%s559 + $0x10] sm:$0xff] %v554
  %v563 = vld [vmem:[%s2] sm:$0x3f]
  %v565 = vperm.slane %v563, 0
  %v566 = vperm.slane %v563, 1
  %v567 = vperm.slane %v563, 2
  %v568 = vperm.slane %v563, 3
  %v569 = vperm.slane %v563, 4
  %v570 = vperm.slane %v563, 5
  %v577 = vmul.f32 %v454, %v565
  %v578 = vmul.f32 %v474, %v566
  %v579 = vmul.f32 %v494, %v567
  %v580 = vmul.f32 %v514, %v568
  %v581 = vmul.f32 %v534, %v569
  %v582 = vmul.f32 %v554, %v570
  %v583 = vadd.f32 %v577, %v578
  %v584 = vadd.f32 %v583, %v579
  %v585 = vadd.f32 %v584, %v580
  %v586 = vadd.f32 %v585, %v581
  %v587 = vadd.f32 %v586, %v582
  %588 = vadd.xlane.f32.xlu0 %v587
  %v589 = vpop.xlane.xlu0 %588
  %vm590 = vcmask 7168
  %591 = vst.msk [vmem:[%s4] sm:$0xff] %vm590, %v589
  %v592 = vmul.f32 %v577, %v577
  %v593 = vmul.f32 %v578, %v578
  %v594 = vmul.f32 %v579, %v579
  %v595 = vmul.f32 %v580, %v580
  %v596 = vmul.f32 %v581, %v581
  %v597 = vmul.f32 %v582, %v582
  %v598 = vadd.f32 %v592, %v593
  %v599 = vadd.f32 %v598, %v594
  %v600 = vadd.f32 %v599, %v595
  %v601 = vadd.f32 %v600, %v596
  %v602 = vadd.f32 %v601, %v597
  %603 = vadd.xlane.f32.xlu0 %v602
  %v604 = vpop.xlane.xlu0 %603
  %605 = vst.msk [vmem:[%s5] sm:$0xff] %vm590, %v604
  // Predicated region
  $region14: #{dil_conv.1} parent=0 // pred_check
    _
  $region15: #{dil_conv.1} parent=0 // pred_check_branch
    %607 = sbr.rel (0) target = $region17
  $region16: #{dil_conv.1} parent=0 // pred_region
    _
  $region17: #{dil_conv.1} parent=0 // pred_fallthru
    _
  // Predicated region
  $region18: #{dil_conv.1} parent=0 // pred_check
    _
  $region19: #{dil_conv.1} parent=0 // pred_check_branch
    %609 = sbr.rel (0) target = $region21
  $region20: #{dil_conv.1} parent=0 // pred_region
    _
  $region21: #{dil_conv.1} parent=0 // pred_fallthru
    _
  // Predicated region
  $region22: #{dil_conv.1} parent=0 // pred_check
    _
  $region23: #{dil_conv.1} parent=0 // pred_check_branch
    %611 = sbr.rel (0) target = $region25
  $region24: #{dil_conv.1} parent=0 // pred_region
    _
  $region25: #{dil_conv.1} parent=0 // pred_fallthru
    _
  // Predicated region
  $region26: #{dil_conv.1} parent=0 // pred_check
    _
  $region27: #{dil_conv.1} parent=0 // pred_check_branch
    %613 = sbr.rel (0) target = $region29
  $region28: #{dil_conv.1} parent=0 // pred_region
    _
  $region29: #{dil_conv.1} parent=0 // pred_fallthru
    _
  // Predicated region
  $region30: #{dil_conv.1} parent=0 // pred_check
    _
  $region31: #{dil_conv.1} parent=0 // pred_check_branch
    %615 = sbr.rel (0) target = $region33
  $region32: #{dil_conv.1} parent=0 // pred_region
    _
  $region33: #{dil_conv.1} parent=0 // pred_fallthru
    _
  // Predicated region
  $region34: #{dil_conv.1} parent=0 // pred_check
    _
  $region35: #{dil_conv.1} parent=0 // pred_check_branch
    %617 = sbr.rel (0) target = $region37
  $region36: #{dil_conv.1} parent=0 // pred_region
    _
  $region37: #{dil_conv.1} parent=0 // pred_fallthru
    _

</llo_original>
